<compile_context>
chip_gen: v7x
topology: tpu7x:2x2x1
jax: 0.10.0
libtpu: 0.0.40
codegen_flags: <defaults>
</compile_context>

<pallas_src>
import math

import jax
import jax.numpy as jnp
from jax.experimental import pallas as pl
from jax.experimental.pallas import tpu as pltpu

_LANE_CAP = 8192               # max lane-slab width considered (multiple of 128)
_MAX_TILE_R = 1024             # target sublane rows per tile (multiple of 8)
_MIN_PALLAS_ELEMS = 256 * 1024 # below this a fused XLA op beats kernel overhead
_VMEM_HEADROOM = 4 << 20


def _normalize_kernel(x_ref, o_ref):
    # Cast up to f32, IEEE divide by 255 (parity with torch x.div(255.0)),
    # cast to the output dtype. Kernel is HBM-bound; VPU/EUP work is free.
    x = x_ref[...].astype(jnp.float32)
    o_ref[...] = (x / jnp.float32(255.0)).astype(o_ref.dtype)


def _pick_lane_slab(total):
    """Largest multiple-of-128 divisor of `total`, capped at _LANE_CAP.

    Returns None when no such divisor exists (caller falls back to XLA)."""
    cap = min(_LANE_CAP, (total // 128) * 128)
    for cand in range(cap, 127, -128):
        if total % cand == 0:
            return cand
    return None


def _vmem_budget_bytes():
    """Scoped-VMEM budget: ~half of physical VMEM, clamped to [16, 48] MiB.

    v5e/v6e (128 MiB) -> 48 MiB; v7x (64 MiB) -> 32 MiB."""
    try:
        physical = pltpu.get_tpu_info().vmem_capacity_bytes
    except Exception:
        physical = 128 << 20
    return int(min(48 << 20, max(16 << 20, physical // 2)))


def _xla_normalize(x, out_dtype):
    return x.astype(out_dtype) / jnp.asarray(255.0, dtype=out_dtype)


def normalize_img(x, *, min_pallas_elems=_MIN_PALLAS_ELEMS):
    """Pallas equivalent of NormalizeImg.forward: x / 255.0.

    Accepts any shape (e.g. NCHW pixel observations). Float inputs keep their
    dtype; integer inputs (typical uint8 pixels) are promoted to float32,
    matching torch's x.div(255.0).
    """
    orig_shape = x.shape
    in_dtype = x.dtype
    out_dtype = in_dtype if jnp.issubdtype(in_dtype, jnp.floating) else jnp.float32

    total = int(math.prod(orig_shape))

    # Small inputs: fixed pallas_call overhead loses to a fused XLA op.
    if total < max(min_pallas_elems, 128):
        return _xla_normalize(x, out_dtype)

    lane_slab = _pick_lane_slab(total)
    if lane_slab is None:
        # No multiple-of-128 factorization: avoid full-tensor padding copies
        # (they would double/triple HBM traffic) and just use XLA.
        return _xla_normalize(x, out_dtype)

    rows = total // lane_slab
    # Contiguous row-major reshape -> free bitcast, no data movement.
    x2d = x.reshape(rows, lane_slab)

    in_itemsize = jnp.dtype(in_dtype).itemsize
    out_itemsize = jnp.dtype(out_dtype).itemsize

    # Largest tile (<= _MAX_TILE_R rows) whose double-buffered in+out tiles
    # fit the per-generation scoped-VMEM budget with headroom.
    vmem_budget = _vmem_budget_bytes()
    bytes_per_row = 2 * lane_slab * (in_itemsize + out_itemsize)  # x2: double-buffered
    max_tile_r = max(8, ((vmem_budget - _VMEM_HEADROOM) // bytes_per_row) // 8 * 8)
    tile_r = min(_MAX_TILE_R, max_tile_r)

    if rows <= tile_r:
        tile_r = rows                      # full-extent block: always a legal shape
        grid = (1,)
    else:
        tile_r = max(8, (tile_r // 8) * 8)
        grid = (pl.cdiv(rows, tile_r),)    # trailing partial block is masked

    tile_bytes = 2 * tile_r * lane_slab * (in_itemsize + out_itemsize)
    vmem_limit = int(min(vmem_budget, max(16 << 20, tile_bytes + _VMEM_HEADROOM)))

    out2d = pl.pallas_call(
        _normalize_kernel,
        out_shape=jax.ShapeDtypeStruct((rows, lane_slab), out_dtype),
        grid=grid,
        in_specs=[pl.BlockSpec((tile_r, lane_slab), lambda i: (i, 0))],
        out_specs=pl.BlockSpec((tile_r, lane_slab), lambda i: (i, 0)),
        compiler_params=pltpu.CompilerParams(
            dimension_semantics=("arbitrary",),
            vmem_limit_bytes=vmem_limit,
        ),
        cost_estimate=pl.CostEstimate(
            flops=total,
            transcendentals=0,
            bytes_accessed=total * (in_itemsize + out_itemsize),
        ),
    )(x2d)

    # Free bitcast reshape back; no padded-output slice pass.
    return out2d.reshape(orig_shape)


if __name__ == "__main__":
    key = jax.random.PRNGKey(0)
    kf, ki, km = jax.random.split(key, 3)

    # 1) Pixel-like observations, float32 NCHW, forced through the Pallas path.
    x_f32 = jax.random.uniform(kf, (2, 4, 16, 16), dtype=jnp.float32,
                               minval=0.0, maxval=255.0)
    y_f32 = normalize_img(x_f32, min_pallas_elems=0)
    jax.block_until_ready(y_f32)
    ref_f32 = x_f32 / 255.0
    assert y_f32.shape == x_f32.shape and y_f32.dtype == x_f32.dtype
    assert jnp.max(jnp.abs(y_f32 - ref_f32)) < 1e-6

    # 2) Typical uint8 pixel observations: narrow HBM read, f32 promoted output.
    x_u8 = jax.random.randint(ki, (2, 4, 16, 16), 0, 256, dtype=jnp.int32).astype(jnp.uint8)
    y_u8 = normalize_img(x_u8, min_pallas_elems=0)
    jax.block_until_ready(y_u8)
    ref_u8 = x_u8.astype(jnp.float32) / 255.0
    assert y_u8.shape == x_u8.shape and y_u8.dtype == jnp.float32
    assert jnp.max(jnp.abs(y_u8 - ref_u8)) < 1e-6

    # 3) Multi-block grid with a masked trailing block (rows not divisible by tile).
    x_big = jax.random.uniform(km, (1, 3, 1031, 128), dtype=jnp.float32,
                               minval=0.0, maxval=255.0)
    y_big = normalize_img(x_big, min_pallas_elems=0)
    jax.block_until_ready(y_big)
    assert y_big.shape == x_big.shape and y_big.dtype == x_big.dtype
    assert jnp.max(jnp.abs(y_big - x_big / 255.0)) < 1e-6

    # 4) Small / non-factorizable shape: XLA fallback path (no Pallas overhead).
    x_odd = jnp.arange(2 * 3 * 5 * 7, dtype=jnp.float32).reshape(2, 3, 5, 7)
    y_odd = normalize_img(x_odd)
    jax.block_until_ready(y_odd)
    assert jnp.max(jnp.abs(y_odd - x_odd / 255.0)) < 1e-6

    print("KERNEL_OK")
</pallas_src>

<mosaic_0001>
module attributes {stable_mosaic.version = 11 : i64} {
  func.func @_normalize_kernel(%arg0: i32, %arg1: memref<1x2048xf32, #tpu.memory_space<vmem>>, %arg2: memref<1x2048xf32, #tpu.memory_space<vmem>>) attributes {dimension_semantics = [#tpu.dimension_semantics<arbitrary>], iteration_bounds = array<i64: 1>, scalar_prefetch = 0 : i64, scratch_operands = 0 : i64, tpu.core_type = #tpu.core_type<tc>, window_params = [{transform_indices = @transform_0, window_bounds = array<i64: 1, 2048>}, {transform_indices = @transform_1, window_bounds = array<i64: 1, 2048>}]} {
    %c0 = arith.constant 0 : index
    %c0_0 = arith.constant 0 : index
    %0 = vector.load %arg1[%c0, %c0_0] : memref<1x2048xf32, #tpu.memory_space<vmem>>, vector<1x2048xf32>
    %cst = arith.constant 2.550000e+02 : f32
    %1 = vector.broadcast %cst : f32 to vector<1x2048xf32>
    %2 = arith.divf %0, %1 : vector<1x2048xf32>
    %c0_1 = arith.constant 0 : index
    %c0_2 = arith.constant 0 : index
    %3 = vector.load %arg2[%c0_1, %c0_2] : memref<1x2048xf32, #tpu.memory_space<vmem>>, vector<1x2048xf32>
    tpu.vector_store %arg2[%c0_1, %c0_2], %2 {strides = array<i32>} : memref<1x2048xf32, #tpu.memory_space<vmem>>, vector<1x2048xf32>,
    return
  }
  func.func @transform_0(%arg0: i32) -> (i32, i32) {
    %c0_i32 = arith.constant 0 : i32
    %c0_i32_0 = arith.constant 0 : i32
    return %arg0, %c0_i32 : i32, i32
  }
  func.func @transform_1(%arg0: i32) -> (i32, i32) {
    %c0_i32 = arith.constant 0 : i32
    %c0_i32_0 = arith.constant 0 : i32
    return %arg0, %c0_i32 : i32, i32
  }
}

</mosaic_0001>

<llo_original>
// kernel: tpu_custom_call.1
$region0: #{tpu_custom_call.1}
  #allocation0 [shape = 'u32[]', space=smem, size = 0x4, offset = 0x4, fixed_abs, tag = 'smem constant byte address 0x4 - core index']
  #allocation1 [shape = 'u32[144,128]{1,0:T(1,128)}', space=vmem, size = 0x12000, scoped, tag = 'internal scratch']
  %s0 = inlined_call_operand.hbm [shape: f32[1,2048], index: 0, kind: input, shape index: {}]
  %s1 = inlined_call_operand.hbm [shape: f32[1,2048], index: 1, kind: output, shape index: {}]
  %s2 = sld [smem:[#allocation0]]
  $region18: #{tpu_custom_call.1} parent=0
    _
  %s4 = ssub.s32 1, %s2
  %s5 = scalar_select 0, %s4, %s2
  $region1: #{tpu_custom_call.1} parent=0
    #allocation2 [shape = 'u8[8192]{0}', space=vmem, size = 0x2000, scoped, tag = 'input window, operand 0, single buffered']
    #allocation3 [shape = 's32[1]{0}', space=sflag, size = 0x4, scoped, tag = 'scoped memory for tpu_custom_call.1']
    #allocation4 [shape = 's32[1]{0}', space=sflag, size = 0x4, scoped, tag = 'scoped memory for tpu_custom_call.1']
    #allocation5 [shape = 'u8[8192]{0}', space=vmem, size = 0x2000, scoped, tag = 'output window, operand 0, single buffered']
    %6 = vsyncpa [#allocation3], 0
    %7 = vsyncpa [#allocation4], 0
    // Predicated region
    $region2: #{tpu_custom_call.1} parent=1 // pred_check
      _
    $region3: #{tpu_custom_call.1} parent=1 // pred_check_branch
      %9 = sbr.rel (0) target = $region5
    $region4: #{tpu_custom_call.1} parent=1 // pred_region
      %s11 = ssub.s32 256, 256
      %12 = vsyncadd [#allocation3], %s11
      %s14 = sshll.u32 [#allocation2], 4
      %s15 = int_to_ptr.vmem [resolvable:$true] %s14
      %17 = dma.hbm_to_vmem [thread:$0]  %s0, 256, %s15, [#allocation3]
    $region5: #{tpu_custom_call.1} parent=1 // pred_fallthru
      _
    // Predicated region
    $region6: #{tpu_custom_call.1} parent=1 // pred_check
      _
    $region7: #{tpu_custom_call.1} parent=1 // pred_check_branch
      %19 = sbr.rel (0) target = $region9
    $region8: #{tpu_custom_call.1} parent=1 // pred_region
      %20 = dma.done [#allocation3], 256
    $region9: #{tpu_custom_call.1} parent=1 // pred_fallthru
      _
    %v21 = vld [vmem:[#allocation2] sm:$0xff]
    %v22 = vld [vmem:[#allocation2 + $0x8] sm:$0xff]
    %v23 = vrcp.pop 255.0
    %v24 = vmul.f32 %v21, %v23
    %v25 = vmul.f32 %v22, %v23
    %26 = vst [vmem:[#allocation5] sm:$0xff] %v24
    %27 = vst [vmem:[#allocation5 + $0x8] sm:$0xff] %v25
    // Predicated region
    $region10: #{tpu_custom_call.1} parent=1 // pred_check
      _
    $region11: #{tpu_custom_call.1} parent=1 // pred_check_branch
      %29 = sbr.rel (0) target = $region13
    $region12: #{tpu_custom_call.1} parent=1 // pred_region
      %s31 = ssub.s32 256, 256
      %32 = vsyncadd [#allocation4], %s31
      %s34 = sshll.u32 [#allocation5], 4
      %s35 = int_to_ptr.vmem [resolvable:$true] %s34
      %37 = dma.vmem_to_hbm [thread:$0]  %s35, 256, %s1, [#allocation4]
    $region13: #{tpu_custom_call.1} parent=1 // pred_fallthru
      _
    // Predicated region
    $region14: #{tpu_custom_call.1} parent=1 // pred_check
      _
    $region15: #{tpu_custom_call.1} parent=1 // pred_check_branch
      %39 = sbr.rel (0) target = $region17
    $region16: #{tpu_custom_call.1} parent=1 // pred_region
      %40 = dma.done [#allocation4], 256
    $region17: #{tpu_custom_call.1} parent=1 // pred_fallthru
      _
    %41 = vsyncpa [#allocation3], 1
    %42 = vsyncpa [#allocation4], 1

</llo_original>
